<compile_context>
chip_gen: v5e
topology: v5e:2x2
jax: 0.10.0
libtpu: 0.0.40
codegen_flags: <defaults>
</compile_context>

<pallas_src>
import jax
import jax.numpy as jnp
from jax.experimental import pallas as pl
from jax.experimental.pallas import tpu as pltpu

EPSILON = 1e-6


def _round_up(x, m):
    return (x + m - 1) // m * m


def _dpp_kernel(x0_ref, x1_ref, wl_ref, wr_ref, o_ref):
    # x0/x1 blocks: (Bt, S, D_in);  wl/wr: (D_in, D_out);  o: (Bt, D_out)
    bt, s, d_in = x0_ref.shape
    x0 = x0_ref[...].astype(jnp.float32)
    x1 = x1_ref[...].astype(jnp.float32)

    # squared norms over the S axis (torch dim=-2), keepdim -> (Bt, 1, D_in)
    inv_l = pl.reciprocal(jnp.sum(x0 * x0, axis=1, keepdims=True) + EPSILON)
    inv_r = pl.reciprocal(jnp.sum(x1 * x1, axis=1, keepdims=True) + EPSILON)

    # normalize, collapse (Bt, S) into one large-M slab for a single matmul
    # per side (cast back to the input dtype so bf16 inputs hit the bf16 MXU
    # path; f32 inputs are a no-op cast).
    x0n = (x0 * inv_l).astype(x0_ref.dtype).reshape(bt * s, d_in)
    x1n = (x1 * inv_r).astype(x1_ref.dtype).reshape(bt * s, d_in)

    yl = jnp.dot(x0n, wl_ref[...], preferred_element_type=jnp.float32)
    yr = jnp.dot(x1n, wr_ref[...], preferred_element_type=jnp.float32)

    prod = (yl * yr).reshape(bt, s, -1)
    o_ref[...] = jnp.sum(prod, axis=1).astype(o_ref.dtype)


def _dpp_self_kernel(x0_ref, wl_ref, wr_ref, o_ref):
    # Self path: x0 streamed from HBM once; normalized tensor reused twice.
    bt, s, d_in = x0_ref.shape
    x0 = x0_ref[...].astype(jnp.float32)

    inv = pl.reciprocal(jnp.sum(x0 * x0, axis=1, keepdims=True) + EPSILON)
    xn = (x0 * inv).astype(x0_ref.dtype).reshape(bt * s, d_in)

    yl = jnp.dot(xn, wl_ref[...], preferred_element_type=jnp.float32)
    yr = jnp.dot(xn, wr_ref[...], preferred_element_type=jnp.float32)

    prod = (yl * yr).reshape(bt, s, -1)
    o_ref[...] = jnp.sum(prod, axis=1).astype(o_ref.dtype)


def dot_product_projection(x0, w_left_t, w_right_t, x1=None, *, block_b=16):
    """x0, x1: (B, S, D_in); w_left_t / w_right_t: (D_in, D_out) pre-transposed
    torch Linear weights.  Returns (B, D_out) float32."""
    B, S, D_in = x0.shape
    D_out = w_left_t.shape[1]

    # Batch tile: at least 8 for sublane-dense output stores, capped by
    # block_b (sized well under the v7x 32 MiB scoped-VMEM default even with
    # double-buffered inputs for these feature sizes).
    Bt = min(_round_up(block_b, 8), _round_up(B, 8))
    Bp = _round_up(B, Bt)
    if Bp != B:
        pad = ((0, Bp - B), (0, 0), (0, 0))
        x0 = jnp.pad(x0, pad)          # zero rows -> zero outputs, sliced off
        if x1 is not None:
            x1 = jnp.pad(x1, pad)
    grid = (Bp // Bt,)

    x_bytes = jnp.dtype(x0.dtype).itemsize
    w_bytes = jnp.dtype(w_left_t.dtype).itemsize
    n_streams = 1 if x1 is None else 2
    cost = pl.CostEstimate(
        flops=4 * Bp * S * D_in * D_out + 6 * Bp * S * D_in,
        transcendentals=0,
        bytes_accessed=(n_streams * Bp * S * D_in * x_bytes
                        + 2 * D_in * D_out * w_bytes
                        + Bp * D_out * 4),
    )
    compiler_params = pltpu.CompilerParams(dimension_semantics=("parallel",))

    x_spec = pl.BlockSpec((Bt, S, D_in), lambda b: (b, 0, 0))
    # Grid-invariant weights (constant index_map keeps them resident in VMEM
    # across grid steps).  Small enough here that default buffering is fine;
    # switch to pipeline_mode=pl.Buffered(1) if VMEM ever gets tight.
    w_spec = pl.BlockSpec((D_in, D_out), lambda b: (0, 0))
    # Lane/sublane-dense output slab: (Bt, D_out) with Bt >= 8.
    o_spec = pl.BlockSpec((Bt, D_out), lambda b: (b, 0))
    out_shape = jax.ShapeDtypeStruct((Bp, D_out), jnp.float32)

    if x1 is None:
        out = pl.pallas_call(
            _dpp_self_kernel,
            out_shape=out_shape,
            grid_spec=pltpu.PrefetchScalarGridSpec(
                num_scalar_prefetch=0,
                grid=grid,
                in_specs=[x_spec, w_spec, w_spec],
                out_specs=o_spec,
            ),
            compiler_params=compiler_params,
            cost_estimate=cost,
        )(x0, w_left_t, w_right_t)
    else:
        out = pl.pallas_call(
            _dpp_kernel,
            out_shape=out_shape,
            grid_spec=pltpu.PrefetchScalarGridSpec(
                num_scalar_prefetch=0,
                grid=grid,
                in_specs=[x_spec, x_spec, w_spec, w_spec],
                out_specs=o_spec,
            ),
            compiler_params=compiler_params,
            cost_estimate=cost,
        )(x0, x1, w_left_t, w_right_t)

    return out[:B] if Bp != B else out


def _reference(x0, w_left, w_right, x1=None):
    """Pure-JAX reference with torch-style (D_out, D_in) weights."""
    if x1 is None:
        x1 = x0
    norm_l = jnp.sum(x0 ** 2, axis=-2, keepdims=True) + EPSILON
    norm_r = jnp.sum(x1 ** 2, axis=-2, keepdims=True) + EPSILON
    yl = (x0 / norm_l) @ w_left.T
    yr = (x1 / norm_r) @ w_right.T
    return jnp.sum(yl * yr, axis=-2)


if __name__ == "__main__":
    key = jax.random.PRNGKey(0)
    k0, k1, kw0, kw1, k2 = jax.random.split(key, 5)

    B, S, D_in, D_out = 2, 8, 32, 32

    x0 = jax.random.normal(k0, (B, S, D_in), dtype=jnp.float32)
    x1 = jax.random.normal(k1, (B, S, D_in), dtype=jnp.float32)

    # torch-Linear-style init: U(-1/sqrt(D_in), 1/sqrt(D_in)), shape (D_out, D_in)
    bound = 1.0 / (D_in ** 0.5)
    w_left = jax.random.uniform(kw0, (D_out, D_in), jnp.float32, -bound, bound)
    w_right = jax.random.uniform(kw1, (D_out, D_in), jnp.float32, -bound, bound)

    # Pre-transpose ONCE (parameter layout), not per forward call.
    w_left_t = w_left.T    # (D_in, D_out)
    w_right_t = w_right.T  # (D_in, D_out)

    # cross path
    out = jax.block_until_ready(dot_product_projection(x0, w_left_t, w_right_t, x1))
    ref = _reference(x0, w_left, w_right, x1)
    assert out.shape == (B, D_out)
    assert jnp.allclose(out, ref, atol=1e-5, rtol=1e-5), (
        f"max abs err {jnp.max(jnp.abs(out - ref))}")

    # self path (x1 is None) -> single-stream kernel
    out_self = jax.block_until_ready(dot_product_projection(x0, w_left_t, w_right_t))
    ref_self = _reference(x0, w_left, w_right)
    assert jnp.allclose(out_self, ref_self, atol=1e-5, rtol=1e-5), (
        f"max abs err {jnp.max(jnp.abs(out_self - ref_self))}")

    # batch not a multiple of the tile -> exercises padding + multi-step grid
    B2 = 20
    x0b = jax.random.normal(k2, (B2, S, D_in), dtype=jnp.float32)
    out_b = jax.block_until_ready(dot_product_projection(x0b, w_left_t, w_right_t))
    ref_b = _reference(x0b, w_left, w_right)
    assert out_b.shape == (B2, D_out)
    assert jnp.allclose(out_b, ref_b, atol=1e-5, rtol=1e-5), (
        f"max abs err {jnp.max(jnp.abs(out_b - ref_b))}")

    print("KERNEL_OK")
</pallas_src>

<mosaic_0001>
module attributes {stable_mosaic.version = 11 : i64} {
  func.func @_dpp_kernel(%arg0: i32, %arg1: memref<8x8x32xf32, #tpu.memory_space<vmem>>, %arg2: memref<8x8x32xf32, #tpu.memory_space<vmem>>, %arg3: memref<32x32xf32, #tpu.memory_space<vmem>>, %arg4: memref<32x32xf32, #tpu.memory_space<vmem>>, %arg5: memref<8x32xf32, #tpu.memory_space<vmem>>) attributes {dimension_semantics = [#tpu.dimension_semantics<parallel>], iteration_bounds = array<i64: 1>, scalar_prefetch = 0 : i64, scratch_operands = 0 : i64, tpu.core_type = #tpu.core_type<tc>, window_params = [{transform_indices = @transform_0, window_bounds = array<i64: 8, 8, 32>}, {transform_indices = @transform_1, window_bounds = array<i64: 8, 8, 32>}, {pipeline_mode = #tpu.pipeline_mode<synchronous>, transform_indices = @transform_2, window_bounds = array<i64: 32, 32>}, {pipeline_mode = #tpu.pipeline_mode<synchronous>, transform_indices = @transform_3, window_bounds = array<i64: 32, 32>}, {transform_indices = @transform_4, window_bounds = array<i64: 8, 32>}]} {
    %c0 = arith.constant 0 : index
    %c0_0 = arith.constant 0 : index
    %c0_1 = arith.constant 0 : index
    %0 = vector.load %arg1[%c0, %c0_0, %c0_1] : memref<8x8x32xf32, #tpu.memory_space<vmem>>, vector<8x8x32xf32>
    %c0_2 = arith.constant 0 : index
    %c0_3 = arith.constant 0 : index
    %c0_4 = arith.constant 0 : index
    %1 = vector.load %arg2[%c0_2, %c0_3, %c0_4] : memref<8x8x32xf32, #tpu.memory_space<vmem>>, vector<8x8x32xf32>
    %2 = arith.mulf %0, %0 : vector<8x8x32xf32>
    %cst = arith.constant dense<0.000000e+00> : vector<8x32xf32>
    %3 = vector.multi_reduction <add>, %2, %cst [1] : vector<8x8x32xf32> to vector<8x32xf32>
    %4 = vector.shape_cast %3 : vector<8x32xf32> to vector<8x1x32xf32>
    %cst_5 = arith.constant 9.99999997E-7 : f32
    %5 = vector.broadcast %cst_5 : f32 to vector<8x1x32xf32>
    %6 = arith.addf %4, %5 : vector<8x1x32xf32>
    %7 = tpu.reciprocal %6 : vector<8x1x32xf32> -> vector<8x1x32xf32>
    %8 = arith.mulf %1, %1 : vector<8x8x32xf32>
    %cst_6 = arith.constant dense<0.000000e+00> : vector<8x32xf32>
    %9 = vector.multi_reduction <add>, %8, %cst_6 [1] : vector<8x8x32xf32> to vector<8x32xf32>
    %10 = vector.shape_cast %9 : vector<8x32xf32> to vector<8x1x32xf32>
    %cst_7 = arith.constant 9.99999997E-7 : f32
    %11 = vector.broadcast %cst_7 : f32 to vector<8x1x32xf32>
    %12 = arith.addf %10, %11 : vector<8x1x32xf32>
    %13 = tpu.reciprocal %12 : vector<8x1x32xf32> -> vector<8x1x32xf32>
    %14 = vector.broadcast %7 : vector<8x1x32xf32> to vector<8x8x32xf32>
    %15 = arith.mulf %0, %14 : vector<8x8x32xf32>
    %16 = vector.shape_cast %15 : vector<8x8x32xf32> to vector<64x32xf32>
    %17 = vector.broadcast %13 : vector<8x1x32xf32> to vector<8x8x32xf32>
    %18 = arith.mulf %1, %17 : vector<8x8x32xf32>
    %19 = vector.shape_cast %18 : vector<8x8x32xf32> to vector<64x32xf32>
    %c0_8 = arith.constant 0 : index
    %c0_9 = arith.constant 0 : index
    %20 = vector.load %arg3[%c0_8, %c0_9] : memref<32x32xf32, #tpu.memory_space<vmem>>, vector<32x32xf32>
    %cst_10 = arith.constant dense<0.000000e+00> : vector<64x32xf32>
    %21 = tpu.matmul %16, %20, %cst_10 {dimension_numbers = #tpu.dot_dimension_numbers<[1], [0], [0], [1], [0, 0, 1, 1], [], []>} : vector<64x32xf32>, vector<32x32xf32>, vector<64x32xf32> -> vector<64x32xf32>
    %c0_11 = arith.constant 0 : index
    %c0_12 = arith.constant 0 : index
    %22 = vector.load %arg4[%c0_11, %c0_12] : memref<32x32xf32, #tpu.memory_space<vmem>>, vector<32x32xf32>
    %cst_13 = arith.constant dense<0.000000e+00> : vector<64x32xf32>
    %23 = tpu.matmul %19, %22, %cst_13 {dimension_numbers = #tpu.dot_dimension_numbers<[1], [0], [0], [1], [0, 0, 1, 1], [], []>} : vector<64x32xf32>, vector<32x32xf32>, vector<64x32xf32> -> vector<64x32xf32>
    %24 = arith.mulf %21, %23 : vector<64x32xf32>
    %25 = vector.shape_cast %24 : vector<64x32xf32> to vector<8x8x32xf32>
    %cst_14 = arith.constant dense<0.000000e+00> : vector<8x32xf32>
    %26 = vector.multi_reduction <add>, %25, %cst_14 [1] : vector<8x8x32xf32> to vector<8x32xf32>
    %c0_15 = arith.constant 0 : index
    %c0_16 = arith.constant 0 : index
    %27 = vector.load %arg5[%c0_15, %c0_16] : memref<8x32xf32, #tpu.memory_space<vmem>>, vector<8x32xf32>
    tpu.vector_store %arg5[%c0_15, %c0_16], %26 {strides = array<i32>} : memref<8x32xf32, #tpu.memory_space<vmem>>, vector<8x32xf32>,
    return
  }
  func.func @transform_0(%arg0: i32) -> (i32, i32, i32) {
    %c0_i32 = arith.constant 0 : i32
    %c0_i32_0 = arith.constant 0 : i32
    %c0_i32_1 = arith.constant 0 : i32
    return %arg0, %c0_i32, %c0_i32_0 : i32, i32, i32
  }
  func.func @transform_1(%arg0: i32) -> (i32, i32, i32) {
    %c0_i32 = arith.constant 0 : i32
    %c0_i32_0 = arith.constant 0 : i32
    %c0_i32_1 = arith.constant 0 : i32
    return %arg0, %c0_i32, %c0_i32_0 : i32, i32, i32
  }
  func.func @transform_2(%arg0: i32) -> (i32, i32) {
    %c0_i32 = arith.constant 0 : i32
    %c0_i32_0 = arith.constant 0 : i32
    %c0_i32_1 = arith.constant 0 : i32
    return %c0_i32, %c0_i32_0 : i32, i32
  }
  func.func @transform_3(%arg0: i32) -> (i32, i32) {
    %c0_i32 = arith.constant 0 : i32
    %c0_i32_0 = arith.constant 0 : i32
    %c0_i32_1 = arith.constant 0 : i32
    return %c0_i32, %c0_i32_0 : i32, i32
  }
  func.func @transform_4(%arg0: i32) -> (i32, i32) {
    %c0_i32 = arith.constant 0 : i32
    %c0_i32_0 = arith.constant 0 : i32
    return %arg0, %c0_i32 : i32, i32
  }
}

</mosaic_0001>

<llo_original>
// kernel: tpu_custom_call.1
$region0: #{tpu_custom_call.1}
  #allocation0 [shape = 'u32[]', space=smem, size = 0x4, offset = 0x4, fixed_abs, tag = 'smem constant byte address 0x4 - core index']
  #allocation1 [shape = 'u32[72,128]{1,0:T(1,128)}', space=vmem, size = 0x9000, scoped, tag = 'internal scratch']
  %s0 = inlined_call_operand.hbm [shape: f32[8,8,32], index: 0, kind: input, shape index: {}]
  %s1 = inlined_call_operand.hbm [shape: f32[8,8,32], index: 1, kind: input, shape index: {}]
  %s2 = inlined_call_operand.hbm [shape: f32[32,32], index: 2, kind: input, shape index: {}]
  %s3 = inlined_call_operand.hbm [shape: f32[32,32], index: 3, kind: input, shape index: {}]
  %s4 = inlined_call_operand.hbm [shape: f32[8,32], index: 4, kind: output, shape index: {}]
  %s5 = sld [smem:[#allocation0]]
  $region42: #{tpu_custom_call.1} parent=0
    _
  %s7 = ssub.s32 1, %s5
  %s8 = scalar_select 0, %s7, %s5
  $region1: #{tpu_custom_call.1} parent=0
    #allocation2 [shape = 'u8[32768]{0}', space=vmem, size = 0x8000, scoped, tag = 'input window, operand 0, single buffered']
    #allocation3 [shape = 's32[1]{0}', space=sflag, size = 0x4, scoped, tag = 'scoped memory for tpu_custom_call.1']
    #allocation4 [shape = 's32[1]{0}', space=sflag, size = 0x4, scoped, tag = 'scoped memory for tpu_custom_call.1']
    #allocation5 [shape = 'u8[32768]{0}', space=vmem, size = 0x8000, scoped, tag = 'input window, operand 1, single buffered']
    #allocation6 [shape = 's32[1]{0}', space=sflag, size = 0x4, scoped, tag = 'scoped memory for tpu_custom_call.1']
    #allocation7 [shape = 'u8[16384]{0}', space=vmem, size = 0x4000, scoped, tag = 'input window, operand 2, single buffered']
    #allocation8 [shape = 'u8[16384]{0}', space=vmem, size = 0x4000, scoped, tag = 'input window, operand 3, single buffered']
    #allocation9 [shape = 's32[1]{0}', space=sflag, size = 0x4, scoped, tag = 'scoped memory for tpu_custom_call.1']
    #allocation10 [shape = 'u8[4096]{0}', space=vmem, size = 0x1000, scoped, tag = 'output window, operand 0, single buffered']
    %9 = vsyncpa [#allocation3], 0
    %10 = vsyncpa [#allocation6], 0
    %11 = vsyncpa [#allocation9], 0
    %12 = vsyncpa [#allocation4], 0
    // Predicated region
    $region2: #{tpu_custom_call.1} parent=1 // pred_check
      _
    $region3: #{tpu_custom_call.1} parent=1 // pred_check_branch
      %14 = sbr.rel (0) target = $region5
    $region4: #{tpu_custom_call.1} parent=1 // pred_region
      %16 = vsyncadd [#allocation3], 0
      %s17 = sshll.u32 %s0, 4
      %s18 = int_to_ptr.hbm [resolvable:$true] %s17
      %s19 = sshll.u32 [#allocation2], 4
      %s20 = int_to_ptr.vmem [resolvable:$true] %s19
      %25 = dma.hbm_to_vmem [thread:$0]  %s18, 1024, %s20, [#allocation3], 128, 128, 8
    $region5: #{tpu_custom_call.1} parent=1 // pred_fallthru
      _
    // Predicated region
    $region6: #{tpu_custom_call.1} parent=1 // pred_check
      _
    $region7: #{tpu_custom_call.1} parent=1 // pred_check_branch
      %27 = sbr.rel (0) target = $region9
    $region8: #{tpu_custom_call.1} parent=1 // pred_region
      %29 = vsyncadd [#allocation6], 0
      %s30 = sshll.u32 %s1, 4
      %s31 = int_to_ptr.hbm [resolvable:$true] %s30
      %s32 = sshll.u32 [#allocation5], 4
      %s33 = int_to_ptr.vmem [resolvable:$true] %s32
      %38 = dma.hbm_to_vmem [thread:$0]  %s31, 1024, %s33, [#allocation6], 128, 128, 8
    $region9: #{tpu_custom_call.1} parent=1 // pred_fallthru
      _
    // Predicated region
    $region10: #{tpu_custom_call.1} parent=1 // pred_check
      _
    $region11: #{tpu_custom_call.1} parent=1 // pred_check_branch
      %40 = sbr.rel (0) target = $region13
    $region12: #{tpu_custom_call.1} parent=1 // pred_region
      %42 = vsyncadd [#allocation6], 0
      %s43 = sshll.u32 %s2, 4
      %s44 = int_to_ptr.hbm [resolvable:$true] %s43
      %s45 = sshll.u32 [#allocation7], 4
      %s46 = int_to_ptr.vmem [resolvable:$true] %s45
      %51 = dma.hbm_to_vmem [thread:$0]  %s44, 512, %s46, [#allocation6], 128, 128, 8
    $region13: #{tpu_custom_call.1} parent=1 // pred_fallthru
      _
    // Predicated region
    $region14: #{tpu_custom_call.1} parent=1 // pred_check
      _
    $region15: #{tpu_custom_call.1} parent=1 // pred_check_branch
      %53 = sbr.rel (0) target = $region17
    $region16: #{tpu_custom_call.1} parent=1 // pred_region
      %55 = vsyncadd [#allocation9], 0
      %s56 = sshll.u32 %s3, 4
      %s57 = int_to_ptr.hbm [resolvable:$true] %s56
      %s58 = sshll.u32 [#allocation8], 4
      %s59 = int_to_ptr.vmem [resolvable:$true] %s58
      %64 = dma.hbm_to_vmem [thread:$0]  %s57, 512, %s59, [#allocation9], 128, 128, 8
    $region17: #{tpu_custom_call.1} parent=1 // pred_fallthru
      _
    // Predicated region
    $region18: #{tpu_custom_call.1} parent=1 // pred_check
      _
    $region19: #{tpu_custom_call.1} parent=1 // pred_check_branch
      %66 = sbr.rel (0) target = $region21
    $region20: #{tpu_custom_call.1} parent=1 // pred_region
      %68 = dma.done [#allocation3], 1024
    $region21: #{tpu_custom_call.1} parent=1 // pred_fallthru
      _
    // Predicated region
    $region22: #{tpu_custom_call.1} parent=1 // pred_check
      _
    $region23: #{tpu_custom_call.1} parent=1 // pred_check_branch
      %70 = sbr.rel (0) target = $region25
    $region24: #{tpu_custom_call.1} parent=1 // pred_region
      %72 = dma.done [#allocation6], 1024
    $region25: #{tpu_custom_call.1} parent=1 // pred_fallthru
      _
    // Predicated region
    $region26: #{tpu_custom_call.1} parent=1 // pred_check
      _
    $region27: #{tpu_custom_call.1} parent=1 // pred_check_branch
      %74 = sbr.rel (0) target = $region29
    $region28: #{tpu_custom_call.1} parent=1 // pred_region
      %76 = dma.done [#allocation6], 512
    $region29: #{tpu_custom_call.1} parent=1 // pred_fallthru
      _
    // Predicated region
    $region30: #{tpu_custom_call.1} parent=1 // pred_check
      _
    $region31: #{tpu_custom_call.1} parent=1 // pred_check_branch
      %78 = sbr.rel (0) target = $region33
    $region32: #{tpu_custom_call.1} parent=1 // pred_region
      %80 = dma.done [#allocation9], 512
    $region33: #{tpu_custom_call.1} parent=1 // pred_fallthru
      _
    %v81 = vld [vmem:[#allocation2] sm:$0xff]
    %v82 = vld [vmem:[#allocation2 + $0x8] sm:$0xff]
    %v83 = vld [vmem:[#allocation2 + $0x10] sm:$0xff]
    %v84 = vld [vmem:[#allocation2 + $0x18] sm:$0xff]
    %v85 = vld [vmem:[#allocation2 + $0x20] sm:$0xff]
    %v86 = vld [vmem:[#allocation2 + $0x28] sm:$0xff]
    %v87 = vld [vmem:[#allocation2 + $0x30] sm:$0xff]
    %v88 = vld [vmem:[#allocation2 + $0x38] sm:$0xff]
    %v89 = vld [vmem:[#allocation5] sm:$0xff]
    %v90 = vld [vmem:[#allocation5 + $0x8] sm:$0xff]
    %v91 = vld [vmem:[#allocation5 + $0x10] sm:$0xff]
    %v92 = vld [vmem:[#allocation5 + $0x18] sm:$0xff]
    %v93 = vld [vmem:[#allocation5 + $0x20] sm:$0xff]
    %v94 = vld [vmem:[#allocation5 + $0x28] sm:$0xff]
    %v95 = vld [vmem:[#allocation5 + $0x30] sm:$0xff]
    %v96 = vld [vmem:[#allocation5 + $0x38] sm:$0xff]
    %v97 = vmul.f32 %v81, %v81
    %v98 = vmul.f32 %v82, %v82
    %v99 = vmul.f32 %v83, %v83
    %v100 = vmul.f32 %v84, %v84
    %v101 = vmul.f32 %v85, %v85
    %v102 = vmul.f32 %v86, %v86
    %v103 = vmul.f32 %v87, %v87
    %v104 = vmul.f32 %v88, %v88
    %vm105 = vcmask 261120
    %v106 = vsel %vm105, %v97, 0.0
    %v107 = vrot.slane %v106, 4
    %v108 = vadd.f32 %v106, %v107
    %v109 = vrot.slane %v108, 2
    %v110 = vadd.f32 %v108, %v109
    %v111 = vrot.slane %v110, 1
    %v112 = vadd.f32 %v110, %v111
    %v113 = vsel %vm105, %v98, 0.0
    %v114 = vrot.slane %v113, 4
    %v115 = vadd.f32 %v113, %v114
    %v116 = vrot.slane %v115, 2
    %v117 = vadd.f32 %v115, %v116
    %v118 = vrot.slane %v117, 1
    %v119 = vadd.f32 %v117, %v118
    %v120 = vsel %vm105, %v99, 0.0
    %v121 = vrot.slane %v120, 4
    %v122 = vadd.f32 %v120, %v121
    %v123 = vrot.slane %v122, 2
    %v124 = vadd.f32 %v122, %v123
    %v125 = vrot.slane %v124, 1
    %v126 = vadd.f32 %v124, %v125
    %v127 = vsel %vm105, %v100, 0.0
    %v128 = vrot.slane %v127, 4
    %v129 = vadd.f32 %v127, %v128
    %v130 = vrot.slane %v129, 2
    %v131 = vadd.f32 %v129, %v130
    %v132 = vrot.slane %v131, 1
    %v133 = vadd.f32 %v131, %v132
    %v134 = vsel %vm105, %v101, 0.0
    %v135 = vrot.slane %v134, 4
    %v136 = vadd.f32 %v134, %v135
    %v137 = vrot.slane %v136, 2
    %v138 = vadd.f32 %v136, %v137
    %v139 = vrot.slane %v138, 1
    %v140 = vadd.f32 %v138, %v139
    %v141 = vsel %vm105, %v102, 0.0
    %v142 = vrot.slane %v141, 4
    %v143 = vadd.f32 %v141, %v142
    %v144 = vrot.slane %v143, 2
    %v145 = vadd.f32 %v143, %v144
    %v146 = vrot.slane %v145, 1
    %v147 = vadd.f32 %v145, %v146
    %v148 = vsel %vm105, %v103, 0.0
    %v149 = vrot.slane %v148, 4
    %v150 = vadd.f32 %v148, %v149
    %v151 = vrot.slane %v150, 2
    %v152 = vadd.f32 %v150, %v151
    %v153 = vrot.slane %v152, 1
    %v154 = vadd.f32 %v152, %v153
    %v155 = vsel %vm105, %v104, 0.0
    %v156 = vrot.slane %v155, 4
    %v157 = vadd.f32 %v155, %v156
    %v158 = vrot.slane %v157, 2
    %v159 = vadd.f32 %v157, %v158
    %v160 = vrot.slane %v159, 1
    %v161 = vadd.f32 %v159, %v160
    %v162 = vadd.f32 %v112, 1e-06
    %v163 = vadd.f32 %v119, 1e-06
    %v164 = vadd.f32 %v126, 1e-06
    %v165 = vadd.f32 %v133, 1e-06
    %v166 = vadd.f32 %v140, 1e-06
    %v167 = vadd.f32 %v147, 1e-06
    %v168 = vadd.f32 %v154, 1e-06
    %v169 = vadd.f32 %v161, 1e-06
    %v170 = vrcp.pop %v162
    %v171 = vmul.f32 %v162, %v170
    %v172 = vsub.f32 1.0, %v171
    %v173 = vmul.f32 %v170, %v172
    %v174 = vadd.f32 %v170, %v173
    %vm175 = vweird.f32 %v162
    %vm176 = vweird.f32 %v170
    %vm177 = vmor %vm175, %vm176
    %v178 = vsel %vm177, %v170, %v174
    %v179 = vand.u32 2147483647, %v162
    %vm180 = vcmp.eq.f32.partialorder %v179, 8.507059e+37
    %v181 = vand.u32 %v162, 2147483648
    %v182 = vor.u32 1.1754944e-38, %v181
    %v183 = vsel %vm180, %v182, %v178
    %v184 = vrcp.pop %v163
    %v185 = vmul.f32 %v163, %v184
    %v186 = vsub.f32 1.0, %v185
    %v187 = vmul.f32 %v184, %v186
    %v188 = vadd.f32 %v184, %v187
    %vm189 = vweird.f32 %v163
    %vm190 = vweird.f32 %v184
    %vm191 = vmor %vm189, %vm190
    %v192 = vsel %vm191, %v184, %v188
    %v193 = vand.u32 2147483647, %v163
    %vm194 = vcmp.eq.f32.partialorder %v193, 8.507059e+37
    %v195 = vand.u32 %v163, 2147483648
    %v196 = vor.u32 1.1754944e-38, %v195
    %v197 = vsel %vm194, %v196, %v192
    %v198 = vrcp.pop %v164
    %v199 = vmul.f32 %v164, %v198
    %v200 = vsub.f32 1.0, %v199
    %v201 = vmul.f32 %v198, %v200
    %v202 = vadd.f32 %v198, %v201
    %vm203 = vweird.f32 %v164
    %vm204 = vweird.f32 %v198
    %vm205 = vmor %vm203, %vm204
    %v206 = vsel %vm205, %v198, %v202
    %v207 = vand.u32 2147483647, %v164
    %vm208 = vcmp.eq.f32.partialorder %v207, 8.507059e+37
    %v209 = vand.u32 %v164, 2147483648
    %v210 = vor.u32 1.1754944e-38, %v209
    %v211 = vsel %vm208, %v210, %v206
    %v212 = vrcp.pop %v165
    %v213 = vmul.f32 %v165, %v212
    %v214 = vsub.f32 1.0, %v213
    %v215 = vmul.f32 %v212, %v214
    %v216 = vadd.f32 %v212, %v215
    %vm217 = vweird.f32 %v165
    %vm218 = vweird.f32 %v212
    %vm219 = vmor %vm217, %vm218
    %v220 = vsel %vm219, %v212, %v216
    %v221 = vand.u32 2147483647, %v165
    %vm222 = vcmp.eq.f32.partialorder %v221, 8.507059e+37
    %v223 = vand.u32 %v165, 2147483648
    %v224 = vor.u32 1.1754944e-38, %v223
    %v225 = vsel %vm222, %v224, %v220
    %v226 = vrcp.pop %v166
    %v227 = vmul.f32 %v166, %v226
    %v228 = vsub.f32 1.0, %v227
    %v229 = vmul.f32 %v226, %v228
    %v230 = vadd.f32 %v226, %v229
    %vm231 = vweird.f32 %v166
    %vm232 = vweird.f32 %v226
    %vm233 = vmor %vm231, %vm232
    %v234 = vsel %vm233, %v226, %v230
    %v235 = vand.u32 2147483647, %v166
    %vm236 = vcmp.eq.f32.partialorder %v235, 8.507059e+37
    %v237 = vand.u32 %v166, 2147483648
    %v238 = vor.u32 1.1754944e-38, %v237
    %v239 = vsel %vm236, %v238, %v234
    %v240 = vrcp.pop %v167
    %v241 = vmul.f32 %v167, %v240
    %v242 = vsub.f32 1.0, %v241
    %v243 = vmul.f32 %v240, %v242
    %v244 = vadd.f32 %v240, %v243
    %vm245 = vweird.f32 %v167
    %vm246 = vweird.f32 %v240
    %vm247 = vmor %vm245, %vm246
    %v248 = vsel %vm247, %v240, %v244
    %v249 = vand.u32 2147483647, %v167
    %vm250 = vcmp.eq.f32.partialorder %v249, 8.507059e+37
    %v251 = vand.u32 %v167, 2147483648
    %v252 = vor.u32 1.1754944e-38, %v251
    %v253 = vsel %vm250, %v252, %v248
    %v254 = vrcp.pop %v168
    %v255 = vmul.f32 %v168, %v254
    %v256 = vsub.f32 1.0, %v255
    %v257 = vmul.f32 %v254, %v256
    %v258 = vadd.f32 %v254, %v257
    %vm259 = vweird.f32 %v168
    %vm260 = vweird.f32 %v254
    %vm261 = vmor %vm259, %vm260
    %v262 = vsel %vm261, %v254, %v258
    %v263 = vand.u32 2147483647, %v168
    %vm264 = vcmp.eq.f32.partialorder %v263, 8.507059e+37
    %v265 = vand.u32 %v168, 2147483648
    %v266 = vor.u32 1.1754944e-38, %v265
    %v267 = vsel %vm264, %v266, %v262
    %v268 = vrcp.pop %v169
    %v269 = vmul.f32 %v169, %v268
    %v270 = vsub.f32 1.0, %v269
    %v271 = vmul.f32 %v268, %v270
    %v272 = vadd.f32 %v268, %v271
    %vm273 = vweird.f32 %v169
    %vm274 = vweird.f32 %v268
    %vm275 = vmor %vm273, %vm274
    %v276 = vsel %vm275, %v268, %v272
    %v277 = vand.u32 2147483647, %v169
    %vm278 = vcmp.eq.f32.partialorder %v277, 8.507059e+37
    %v279 = vand.u32 %v169, 2147483648
    %v280 = vor.u32 1.1754944e-38, %v279
    %v281 = vsel %vm278, %v280, %v276
    %v282 = vmul.f32 %v89, %v89
    %v283 = vmul.f32 %v90, %v90
    %v284 = vmul.f32 %v91, %v91
    %v285 = vmul.f32 %v92, %v92
    %v286 = vmul.f32 %v93, %v93
    %v287 = vmul.f32 %v94, %v94
    %v288 = vmul.f32 %v95, %v95
    %v289 = vmul.f32 %v96, %v96
    %v290 = vsel %vm105, %v282, 0.0
    %v291 = vrot.slane %v290, 4
    %v292 = vadd.f32 %v290, %v291
    %v293 = vrot.slane %v292, 2
    %v294 = vadd.f32 %v292, %v293
    %v295 = vrot.slane %v294, 1
    %v296 = vadd.f32 %v294, %v295
    %v297 = vsel %vm105, %v283, 0.0
    %v298 = vrot.slane %v297, 4
    %v299 = vadd.f32 %v297, %v298
    %v300 = vrot.slane %v299, 2
    %v301 = vadd.f32 %v299, %v300
    %v302 = vrot.slane %v301, 1
    %v303 = vadd.f32 %v301, %v302
    %v304 = vsel %vm105, %v284, 0.0
    %v305 = vrot.slane %v304, 4
    %v306 = vadd.f32 %v304, %v305
    %v307 = vrot.slane %v306, 2
    %v308 = vadd.f32 %v306, %v307
    %v309 = vrot.slane %v308, 1
    %v310 = vadd.f32 %v308, %v309
    %v311 = vsel %vm105, %v285, 0.0
    %v312 = vrot.slane %v311, 4
    %v313 = vadd.f32 %v311, %v312
    %v314 = vrot.slane %v313, 2
    %v315 = vadd.f32 %v313, %v314
    %v316 = vrot.slane %v315, 1
    %v317 = vadd.f32 %v315, %v316
    %v318 = vsel %vm105, %v286, 0.0
    %v319 = vrot.slane %v318, 4
    %v320 = vadd.f32 %v318, %v319
    %v321 = vrot.slane %v320, 2
    %v322 = vadd.f32 %v320, %v321
    %v323 = vrot.slane %v322, 1
    %v324 = vadd.f32 %v322, %v323
    %v325 = vsel %vm105, %v287, 0.0
    %v326 = vrot.slane %v325, 4
    %v327 = vadd.f32 %v325, %v326
    %v328 = vrot.slane %v327, 2
    %v329 = vadd.f32 %v327, %v328
    %v330 = vrot.slane %v329, 1
    %v331 = vadd.f32 %v329, %v330
    %v332 = vsel %vm105, %v288, 0.0
    %v333 = vrot.slane %v332, 4
    %v334 = vadd.f32 %v332, %v333
    %v335 = vrot.slane %v334, 2
    %v336 = vadd.f32 %v334, %v335
    %v337 = vrot.slane %v336, 1
    %v338 = vadd.f32 %v336, %v337
    %v339 = vsel %vm105, %v289, 0.0
    %v340 = vrot.slane %v339, 4
    %v341 = vadd.f32 %v339, %v340
    %v342 = vrot.slane %v341, 2
    %v343 = vadd.f32 %v341, %v342
    %v344 = vrot.slane %v343, 1
    %v345 = vadd.f32 %v343, %v344
    %v346 = vadd.f32 %v296, 1e-06
    %v347 = vadd.f32 %v303, 1e-06
    %v348 = vadd.f32 %v310, 1e-06
    %v349 = vadd.f32 %v317, 1e-06
    %v350 = vadd.f32 %v324, 1e-06
    %v351 = vadd.f32 %v331, 1e-06
    %v352 = vadd.f32 %v338, 1e-06
    %v353 = vadd.f32 %v345, 1e-06
    %v354 = vrcp.pop %v346
    %v355 = vmul.f32 %v346, %v354
    %v356 = vsub.f32 1.0, %v355
    %v357 = vmul.f32 %v354, %v356
    %v358 = vadd.f32 %v354, %v357
    %vm359 = vweird.f32 %v346
    %vm360 = vweird.f32 %v354
    %vm361 = vmor %vm359, %vm360
    %v362 = vsel %vm361, %v354, %v358
    %v363 = vand.u32 2147483647, %v346
    %vm364 = vcmp.eq.f32.partialorder %v363, 8.507059e+37
    %v365 = vand.u32 %v346, 2147483648
    %v366 = vor.u32 1.1754944e-38, %v365
    %v367 = vsel %vm364, %v366, %v362
    %v368 = vrcp.pop %v347
    %v369 = vmul.f32 %v347, %v368
    %v370 = vsub.f32 1.0, %v369
    %v371 = vmul.f32 %v368, %v370
    %v372 = vadd.f32 %v368, %v371
    %vm373 = vweird.f32 %v347
    %vm374 = vweird.f32 %v368
    %vm375 = vmor %vm373, %vm374
    %v376 = vsel %vm375, %v368, %v372
    %v377 = vand.u32 2147483647, %v347
    %vm378 = vcmp.eq.f32.partialorder %v377, 8.507059e+37
    %v379 = vand.u32 %v347, 2147483648
    %v380 = vor.u32 1.1754944e-38, %v379
    %v381 = vsel %vm378, %v380, %v376
    %v382 = vrcp.pop %v348
    %v383 = vmul.f32 %v348, %v382
    %v384 = vsub.f32 1.0, %v383
    %v385 = vmul.f32 %v382, %v384
    %v386 = vadd.f32 %v382, %v385
    %vm387 = vweird.f32 %v348
    %vm388 = vweird.f32 %v382
    %vm389 = vmor %vm387, %vm388
    %v390 = vsel %vm389, %v382, %v386
    %v391 = vand.u32 2147483647, %v348
    %vm392 = vcmp.eq.f32.partialorder %v391, 8.507059e+37
    %v393 = vand.u32 %v348, 2147483648
    %v394 = vor.u32 1.1754944e-38, %v393
    %v395 = vsel %vm392, %v394, %v390
    %v396 = vrcp.pop %v349
    %v397 = vmul.f32 %v349, %v396
    %v398 = vsub.f32 1.0, %v397
    %v399 = vmul.f32 %v396, %v398
    %v400 = vadd.f32 %v396, %v399
    %vm401 = vweird.f32 %v349
    %vm402 = vweird.f32 %v396
    %vm403 = vmor %vm401, %vm402
    %v404 = vsel %vm403, %v396, %v400
    %v405 = vand.u32 2147483647, %v349
    %vm406 = vcmp.eq.f32.partialorder %v405, 8.507059e+37
    %v407 = vand.u32 %v349, 2147483648
    %v408 = vor.u32 1.1754944e-38, %v407
    %v409 = vsel %vm406, %v408, %v404
    %v410 = vrcp.pop %v350
    %v411 = vmul.f32 %v350, %v410
    %v412 = vsub.f32 1.0, %v411
    %v413 = vmul.f32 %v410, %v412
    %v414 = vadd.f32 %v410, %v413
    %vm415 = vweird.f32 %v350
    %vm416 = vweird.f32 %v410
    %vm417 = vmor %vm415, %vm416
    %v418 = vsel %vm417, %v410, %v414
    %v419 = vand.u32 2147483647, %v350
    %vm420 = vcmp.eq.f32.partialorder %v419, 8.507059e+37
    %v421 = vand.u32 %v350, 2147483648
    %v422 = vor.u32 1.1754944e-38, %v421
    %v423 = vsel %vm420, %v422, %v418
    %v424 = vrcp.pop %v351
    %v425 = vmul.f32 %v351, %v424
    %v426 = vsub.f32 1.0, %v425
    %v427 = vmul.f32 %v424, %v426
    %v428 = vadd.f32 %v424, %v427
    %vm429 = vweird.f32 %v351
    %vm430 = vweird.f32 %v424
    %vm431 = vmor %vm429, %vm430
    %v432 = vsel %vm431, %v424, %v428
    %v433 = vand.u32 2147483647, %v351
    %vm434 = vcmp.eq.f32.partialorder %v433, 8.507059e+37
    %v435 = vand.u32 %v351, 2147483648
    %v436 = vor.u32 1.1754944e-38, %v435
    %v437 = vsel %vm434, %v436, %v432
    %v438 = vrcp.pop %v352
    %v439 = vmul.f32 %v352, %v438
    %v440 = vsub.f32 1.0, %v439
    %v441 = vmul.f32 %v438, %v440
    %v442 = vadd.f32 %v438, %v441
    %vm443 = vweird.f32 %v352
    %vm444 = vweird.f32 %v438
    %vm445 = vmor %vm443, %vm444
    %v446 = vsel %vm445, %v438, %v442
    %v447 = vand.u32 2147483647, %v352
    %vm448 = vcmp.eq.f32.partialorder %v447, 8.507059e+37
    %v449 = vand.u32 %v352, 2147483648
    %v450 = vor.u32 1.1754944e-38, %v449
    %v451 = vsel %vm448, %v450, %v446
    %v452 = vrcp.pop %v353
    %v453 = vmul.f32 %v353, %v452
    %v454 = vsub.f32 1.0, %v453
    %v455 = vmul.f32 %v452, %v454
    %v456 = vadd.f32 %v452, %v455
    %vm457 = vweird.f32 %v353
    %vm458 = vweird.f32 %v452
    %vm459 = vmor %vm457, %vm458
    %v460 = vsel %vm459, %v452, %v456
    %v461 = vand.u32 2147483647, %v353
    %vm462 = vcmp.eq.f32.partialorder %v461, 8.507059e+37
    %v463 = vand.u32 %v353, 2147483648
    %v464 = vor.u32 1.1754944e-38, %v463
    %v465 = vsel %vm462, %v464, %v460
    %v466 = vmul.f32 %v81, %v183
    %v467 = vmul.f32 %v82, %v197
    %v468 = vmul.f32 %v83, %v211
    %v469 = vmul.f32 %v84, %v225
    %v470 = vmul.f32 %v85, %v239
    %v471 = vmul.f32 %v86, %v253
    %v472 = vmul.f32 %v87, %v267
    %v473 = vmul.f32 %v88, %v281
    %v474 = vmul.f32 %v89, %v367
    %v475 = vmul.f32 %v90, %v381
    %v476 = vmul.f32 %v91, %v395
    %v477 = vmul.f32 %v92, %v409
    %v478 = vmul.f32 %v93, %v423
    %v479 = vmul.f32 %v94, %v437
    %v480 = vmul.f32 %v95, %v451
    %v481 = vmul.f32 %v96, %v465
    %v482 = vld [vmem:[#allocation7] sm:$0xff]
    %v483 = vld [vmem:[#allocation7 + $0x8] sm:$0xff]
    %v484 = vld [vmem:[#allocation7 + $0x10] sm:$0xff]
    %v485 = vld [vmem:[#allocation7 + $0x18] sm:$0xff]
    %v487 = vsel %vm105, %v466, 0
    %v490 = vsel %vm105, %v467, 0
    %v493 = vsel %vm105, %v468, 0
    %v496 = vsel %vm105, %v469, 0
    %v499 = vsel %vm105, %v470, 0
    %v502 = vsel %vm105, %v471, 0
    %v505 = vsel %vm105, %v472, 0
    %v508 = vsel %vm105, %v473, 0
    %510 = vmatpush.msra.mxu0 0.0
    %511 = vmatpush.msra.mxu0 0.0
    %512 = vmatpush.msra.mxu0 0.0
    %513 = vmatpush.msra.mxu0 0.0
    %514 = vmatpush.msra.mxu0 0.0
    %515 = vmatpush.msra.mxu0 0.0
    %516 = vmatpush.msra.mxu0 0.0
    %517 = vmatpush.msra.mxu0 0.0
    %518 = vmatpush.msra.mxu0 0.0
    %519 = vmatpush.msra.mxu0 0.0
    %520 = vmatpush.msra.mxu0 0.0
    %521 = vmatpush.msra.mxu0 0.0
    %522 = vmatpush.msra.mxu0 %v485
    %523 = vmatpush.msra.mxu0 %v484
    %524 = vmatpush.msra.mxu0 %v483
    %525 = vmatpush.msra.mxu0 %v482
    %526 = vmatmul.f32.gmra.mxu0 %v487
    %v527 = vpop.f32.mrf.mxu0
    %v528 = vadd.f32 0.0, %v527
    %529 = vmatmul.f32.gmra.mxu0 %v490
    %v530 = vpop.f32.mrf.mxu0
    %v531 = vadd.f32 0.0, %v530
    %532 = vmatmul.f32.gmra.mxu0 %v493
    %v533 = vpop.f32.mrf.mxu0
    %v534 = vadd.f32 0.0, %v533
    %535 = vmatmul.f32.gmra.mxu0 %v496
    %v536 = vpop.f32.mrf.mxu0
    %v537 = vadd.f32 0.0, %v536
    %538 = vmatmul.f32.gmra.mxu0 %v499
    %v539 = vpop.f32.mrf.mxu0
    %v540 = vadd.f32 0.0, %v539
    %541 = vmatmul.f32.gmra.mxu0 %v502
    %v542 = vpop.f32.mrf.mxu0
    %v543 = vadd.f32 0.0, %v542
    %544 = vmatmul.f32.gmra.mxu0 %v505
    %v545 = vpop.f32.mrf.mxu0
    %v546 = vadd.f32 0.0, %v545
    %547 = vmatmul.f32.gmra.mxu0 %v508
    %v548 = vpop.f32.mrf.mxu0
    %v549 = vadd.f32 0.0, %v548
    %550 = vdwg.mxu0
    %v551 = vld [vmem:[#allocation8] sm:$0xff]
    %v552 = vld [vmem:[#allocation8 + $0x8] sm:$0xff]
    %v553 = vld [vmem:[#allocation8 + $0x10] sm:$0xff]
    %v554 = vld [vmem:[#allocation8 + $0x18] sm:$0xff]
    %v556 = vsel %vm105, %v474, 0
    %v559 = vsel %vm105, %v475, 0
    %v562 = vsel %vm105, %v476, 0
    %v565 = vsel %vm105, %v477, 0
    %v568 = vsel %vm105, %v478, 0
    %v571 = vsel %vm105, %v479, 0
    %v574 = vsel %vm105, %v480, 0
    %v577 = vsel %vm105, %v481, 0
    %579 = vmatpush.msra.mxu0 0.0
    %580 = vmatpush.msra.mxu0 0.0
    %581 = vmatpush.msra.mxu0 0.0
    %582 = vmatpush.msra.mxu0 0.0
    %583 = vmatpush.msra.mxu0 0.0
    %584 = vmatpush.msra.mxu0 0.0
    %585 = vmatpush.msra.mxu0 0.0
    %586 = vmatpush.msra.mxu0 0.0
    %587 = vmatpush.msra.mxu0 0.0
    %588 = vmatpush.msra.mxu0 0.0
    %589 = vmatpush.msra.mxu0 0.0
    %590 = vmatpush.msra.mxu0 0.0
    %591 = vmatpush.msra.mxu0 %v554
    %592 = vmatpush.msra.mxu0 %v553
    %593 = vmatpush.msra.mxu0 %v552
    %594 = vmatpush.msra.mxu0 %v551
    %595 = vmatmul.f32.gmra.mxu0 %v556
    %v596 = vpop.f32.mrf.mxu0
    %v597 = vadd.f32 0.0, %v596
    %598 = vmatmul.f32.gmra.mxu0 %v559
    %v599 = vpop.f32.mrf.mxu0
    %v600 = vadd.f32 0.0, %v599
    %601 = vmatmul.f32.gmra.mxu0 %v562
    %v602 = vpop.f32.mrf.mxu0
    %v603 = vadd.f32 0.0, %v602
    %604 = vmatmul.f32.gmra.mxu0 %v565
    %v605 = vpop.f32.mrf.mxu0
    %v606 = vadd.f32 0.0, %v605
    %607 = vmatmul.f32.gmra.mxu0 %v568
    %v608 = vpop.f32.mrf.mxu0
    %v609 = vadd.f32 0.0, %v608
    %610 = vmatmul.f32.gmra.mxu0 %v571
    %v611 = vpop.f32.mrf.mxu0
    %v612 = vadd.f32 0.0, %v611
    %613 = vmatmul.f32.gmra.mxu0 %v574
    %v614 = vpop.f32.mrf.mxu0
    %v615 = vadd.f32 0.0, %v614
    %616 = vmatmul.f32.gmra.mxu0 %v577
    %v617 = vpop.f32.mrf.mxu0
    %v618 = vadd.f32 0.0, %v617
    %619 = vdwg.mxu0
    %v620 = vmul.f32 %v528, %v597
    %v621 = vmul.f32 %v531, %v600
    %v622 = vmul.f32 %v534, %v603
    %v623 = vmul.f32 %v537, %v606
    %v624 = vmul.f32 %v540, %v609
    %v625 = vmul.f32 %v543, %v612
    %v626 = vmul.f32 %v546, %v615
    %v627 = vmul.f32 %v549, %v618
    %v628 = vsel %vm105, %v620, 0.0
    %v629 = vrot.slane %v628, 4
    %v630 = vadd.f32 %v628, %v629
    %v631 = vrot.slane %v630, 2
    %v632 = vadd.f32 %v630, %v631
    %v633 = vrot.slane %v632, 1
    %v634 = vadd.f32 %v632, %v633
    %v635 = vsel %vm105, %v621, 0.0
    %v636 = vrot.slane %v635, 4
    %v637 = vadd.f32 %v635, %v636
    %v638 = vrot.slane %v637, 2
    %v639 = vadd.f32 %v637, %v638
    %v640 = vrot.slane %v639, 1
    %v641 = vadd.f32 %v639, %v640
    %v642 = vsel %vm105, %v622, 0.0
    %v643 = vrot.slane %v642, 4
    %v644 = vadd.f32 %v642, %v643
    %v645 = vrot.slane %v644, 2
    %v646 = vadd.f32 %v644, %v645
    %v647 = vrot.slane %v646, 1
    %v648 = vadd.f32 %v646, %v647
    %v649 = vsel %vm105, %v623, 0.0
    %v650 = vrot.slane %v649, 4
    %v651 = vadd.f32 %v649, %v650
    %v652 = vrot.slane %v651, 2
    %v653 = vadd.f32 %v651, %v652
    %v654 = vrot.slane %v653, 1
    %v655 = vadd.f32 %v653, %v654
    %v656 = vsel %vm105, %v624, 0.0
    %v657 = vrot.slane %v656, 4
    %v658 = vadd.f32 %v656, %v657
    %v659 = vrot.slane %v658, 2
    %v660 = vadd.f32 %v658, %v659
    %v661 = vrot.slane %v660, 1
    %v662 = vadd.f32 %v660, %v661
    %v663 = vsel %vm105, %v625, 0.0
    %v664 = vrot.slane %v663, 4
    %v665 = vadd.f32 %v663, %v664
    %v666 = vrot.slane %v665, 2
    %v667 = vadd.f32 %v665, %v666
    %v668 = vrot.slane %v667, 1
    %v669 = vadd.f32 %v667, %v668
    %v670 = vsel %vm105, %v626, 0.0
    %v671 = vrot.slane %v670, 4
    %v672 = vadd.f32 %v670, %v671
    %v673 = vrot.slane %v672, 2
    %v674 = vadd.f32 %v672, %v673
    %v675 = vrot.slane %v674, 1
    %v676 = vadd.f32 %v674, %v675
    %v677 = vsel %vm105, %v627, 0.0
    %v678 = vrot.slane %v677, 4
    %v679 = vadd.f32 %v677, %v678
    %v680 = vrot.slane %v679, 2
    %v681 = vadd.f32 %v679, %v680
    %v682 = vrot.slane %v681, 1
    %v683 = vadd.f32 %v681, %v682
    %vm692 = vcmask 1041409
    %v693 = vsel %vm692, %v641, %v634
    %vm694 = vcmask 1042434
    %v695 = vsel %vm694, %v648, %v693
    %vm696 = vcmask 1043459
    %v697 = vsel %vm696, %v655, %v695
    %vm698 = vcmask 1044484
    %v699 = vsel %vm698, %v662, %v697
    %vm700 = vcmask 1045509
    %v701 = vsel %vm700, %v669, %v699
    %vm702 = vcmask 1046534
    %v703 = vsel %vm702, %v676, %v701
    %vm704 = vcmask 1047559
    %v705 = vsel %vm704, %v683, %v703
    %707 = vst.msk [vmem:[#allocation10] sm:$0xff] %vm105, %v705
    // Predicated region
    $region34: #{tpu_custom_call.1} parent=1 // pred_check
      _
    $region35: #{tpu_custom_call.1} parent=1 // pred_check_branch
      %709 = sbr.rel (0) target = $region37
    $region36: #{tpu_custom_call.1} parent=1 // pred_region
      %711 = vsyncadd [#allocation4], 0
      %s713 = sshll.u32 [#allocation10], 4
      %s714 = int_to_ptr.vmem [resolvable:$true] %s713
      %s715 = sshll.u32 %s4, 4
      %s716 = int_to_ptr.hbm [resolvable:$true] %s715
      %718 = dma.vmem_to_hbm [thread:$0]  %s714, 128, %s716, [#allocation4]
    $region37: #{tpu_custom_call.1} parent=1 // pred_fallthru
      _
    // Predicated region
    $region38: #{tpu_custom_call.1} parent=1 // pred_check
      _
    $region39: #{tpu_custom_call.1} parent=1 // pred_check_branch
      %720 = sbr.rel (0) target = $region41
    $region40: #{tpu_custom_call.1} parent=1 // pred_region
      %722 = dma.done [#allocation4], 128
    $region41: #{tpu_custom_call.1} parent=1 // pred_fallthru
      _
    %723 = vsyncpa [#allocation3], 1
    %724 = vsyncpa [#allocation6], 1
    %725 = vsyncpa [#allocation9], 1
    %726 = vsyncpa [#allocation4], 1

</llo_original>
